<compile_context>
chip_gen: v7x
topology: tpu7x:2x2x1
jax: 0.10.0
libtpu: 0.0.40
codegen_flags: <defaults>
</compile_context>

<pallas_src>
import functools
import math

import jax
import jax.numpy as jnp
from jax.experimental import pallas as pl
from jax.experimental.pallas import tpu as pltpu


def _round_up(x, m):
    return ((x + m - 1) // m) * m


def _vmem_limit_bytes():
    """Per-generation scoped-VMEM budget for the pallas_call."""
    try:
        kind = jax.devices()[0].device_kind.lower()
    except Exception:
        kind = ""
    if "v7" in kind:
        return 48 * 1024 * 1024      # v7x: 64 MiB physical per TensorCore
    return 64 * 1024 * 1024          # v5e / v6e: 128 MiB physical


def gnn_rel_kernel(adj_ref, rel_ref, inp_ref, w1_ref, rel_w_ref, b_ref,
                   out_ref, *, is_relu, small_s, vpu_rel):
    # Blocks per grid step:
    #   adj_ref : (TB, S, S) int8      rel_ref  : (TB*S, L) f32
    #   inp_ref : (TB, S, D) bf16
    #   w1_ref  : (D, Hp)    bf16      rel_w_ref: (L, Hp)   f32
    #   b_ref   : (1, Hp)    f32       out_ref  : (TB*S, Hp) bf16
    tb, s, d = inp_ref.shape
    m, _ = out_ref.shape

    inp = inp_ref[...]                                     # (TB,S,D) bf16
    if small_s:
        # S << MXU tile: neighbour mix as S unrolled broadcast-FMAs on the
        # VPU (f32, residual folded in) instead of tiny (S,S)x(S,D) matmuls.
        adj = adj_ref[...].astype(jnp.float32)             # int8 -> f32 (VPU)
        x = inp.astype(jnp.float32)
        neigh = x                                          # "+ inp" residual
        for j in range(s):                                 # static unroll
            neigh = neigh + adj[:, :, j:j + 1] * x[:, j:j + 1, :]
    else:
        adj = adj_ref[...].astype(jnp.bfloat16)
        neigh = jnp.einsum('bij,bjd->bid', adj, inp,
                           preferred_element_type=jnp.float32)
        neigh = neigh + inp.astype(jnp.float32)

    # Main projection: one MXU matmul with M = TB*S rows, f32 accumulation.
    neigh2d = neigh.reshape(m, d).astype(jnp.bfloat16)
    out = jnp.dot(neigh2d, w1_ref[...], preferred_element_type=jnp.float32)

    # Relation term: K = L is tiny, so run L broadcast-FMAs on the VPU
    # (different VLIW slot -> overlaps with the MXU work above).
    rel = rel_ref[...]                                     # (M, L)  f32
    rel_w = rel_w_ref[...]                                 # (L, Hp) f32
    if vpu_rel:
        for l in range(rel.shape[-1]):                     # static unroll
            out = out + rel[:, l:l + 1] * rel_w[l:l + 1, :]
    else:
        out = out + jnp.dot(rel.astype(jnp.bfloat16),
                            rel_w.astype(jnp.bfloat16),
                            preferred_element_type=jnp.float32)

    out = out + b_ref[...]                                 # f32 bias
    if is_relu:
        out = jnp.maximum(out, 0.0)
    out_ref[...] = out.astype(out_ref.dtype)               # bf16 lane-dense vst


@functools.partial(jax.jit, static_argnames=("is_relu",))
def gnn_rel(inp, adj_full, rel_emb, W, bias, is_relu=True):
    B, S, D = inp.shape
    L = adj_full.shape[-1]
    H = W.shape[1]
    out_dtype = inp.dtype

    # Single consumer pass over adj_full (B,S,S,L): both reductions are
    # sibling reduces of the same operand inside one jit -> one HBM read.
    adj = jnp.sum(adj_full, axis=-1)       # (B,S,S) relation counts per edge
    adj_rel = jnp.sum(adj_full, axis=2)    # (B,S,L) reduce over neighbour j

    # Fold rel_emb into the second half of W once (weight-only transform):
    # concat([neigh, adj_rel @ rel_emb]) @ W == neigh @ W1 + adj_rel @ rel_w.
    W1 = W[:D, :]
    rel_w = jnp.dot(rel_emb, W[D:, :])     # (L, H)

    # Lane-dense output: pad H to a multiple of 128 (zero cols, sliced off).
    Hp = _round_up(H, 128)
    pad_cols = ((0, 0), (0, Hp - H))
    W1 = jnp.pad(W1, pad_cols).astype(jnp.bfloat16)
    rel_w = jnp.pad(rel_w, pad_cols).astype(jnp.float32)
    bias_p = jnp.pad(bias.reshape(1, H), pad_cols).astype(jnp.float32)

    # adj holds small integer relation counts (<= L for 0/1 adjacency), so
    # int8 is exact and halves the dominant HBM stream.  adj_rel (sums up to
    # S) stays f32 -- its traffic is tiny.
    adj_i8 = adj.astype(jnp.int8)
    adj_rel = adj_rel.astype(jnp.float32)
    inp_b = inp.astype(jnp.bfloat16)

    # --- TB sizing from padded block footprints vs a per-generation VMEM
    # budget.  TB*S stays a multiple of 16 so the 2D blocks are sublane
    # aligned; TB is capped near cdiv(B,2) so the grid keeps >= 2 steps
    # (v7x megacore) whenever the batch allows it.
    def _block_bytes(tb):
        rows = tb * S
        adj_b = tb * _round_up(S, 32) * _round_up(S, 128) * 1          # int8
        inp_bb = tb * _round_up(S, 16) * _round_up(D, 128) * 2         # bf16
        rel_b = _round_up(rows, 8) * _round_up(L, 128) * 4             # f32
        out_b = _round_up(rows, 16) * Hp * 2                           # bf16
        streamed = 2 * (adj_b + inp_bb + rel_b + out_b)                # 2 bufs
        resident = (_round_up(D, 16) * Hp * 2                          # W1
                    + _round_up(L, 8) * Hp * 4                         # rel_w
                    + 8 * Hp * 4)                                      # bias
        interm = (2 * _round_up(rows, 8) * _round_up(D, 128) * 4       # x,neigh
                  + _round_up(rows, 8) * Hp * 4)                       # f32 acc
        return streamed + resident + interm

    vmem_limit = _vmem_limit_bytes()
    budget = int(0.45 * vmem_limit)
    row_mult = math.lcm(S, 16) // S        # smallest TB with TB*S % 16 == 0
    if B > row_mult:
        tb_cap = _round_up(pl.cdiv(B, 2), row_mult)
    else:
        tb_cap = row_mult
    TB = row_mult
    while TB + row_mult <= tb_cap and _block_bytes(TB + row_mult) <= budget:
        TB += row_mult

    B_pad = pl.cdiv(B, TB) * TB
    if B_pad != B:
        bpad = ((0, B_pad - B), (0, 0), (0, 0))
        adj_i8 = jnp.pad(adj_i8, bpad)
        adj_rel = jnp.pad(adj_rel, bpad)
        inp_b = jnp.pad(inp_b, bpad)
    rel2d = adj_rel.reshape(B_pad * S, L)

    kernel = functools.partial(gnn_rel_kernel, is_relu=is_relu,
                               small_s=(S <= 32), vpu_rel=(L <= 16))
    M_pad = B_pad * S
    flops = 2 * M_pad * (S * D + D * Hp + L * Hp)
    bytes_accessed = (B_pad * S * S * 1 + M_pad * L * 4 + M_pad * D * 2
                      + D * Hp * 2 + L * Hp * 4 + Hp * 4 + M_pad * Hp * 2)

    out2d = pl.pallas_call(
        kernel,
        out_shape=jax.ShapeDtypeStruct((M_pad, Hp), jnp.bfloat16),
        grid=(B_pad // TB,),
        in_specs=[
            pl.BlockSpec((TB, S, S), lambda b: (b, 0, 0)),             # adj i8
            pl.BlockSpec((TB * S, L), lambda b: (b, 0)),               # adj_rel
            pl.BlockSpec((TB, S, D), lambda b: (b, 0, 0)),             # inp
            pl.BlockSpec((D, Hp), lambda b: (0, 0),
                         pipeline_mode=pl.Buffered(1)),                # W1
            pl.BlockSpec((L, Hp), lambda b: (0, 0),
                         pipeline_mode=pl.Buffered(1)),                # rel_w
            pl.BlockSpec((1, Hp), lambda b: (0, 0),
                         pipeline_mode=pl.Buffered(1)),                # bias
        ],
        out_specs=pl.BlockSpec((TB * S, Hp), lambda b: (b, 0)),
        compiler_params=pltpu.CompilerParams(
            dimension_semantics=("parallel",),
            vmem_limit_bytes=vmem_limit),
        cost_estimate=pl.CostEstimate(flops=flops, transcendentals=0,
                                      bytes_accessed=bytes_accessed),
    )(adj_i8, rel2d, inp_b, W1, rel_w, bias_p)

    out = out2d.reshape(B_pad, S, Hp)[:B, :, :H]
    return out.astype(out_dtype)


def gnn_rel_reference(inp, adj_full, rel_emb, W, bias, *, is_relu=True):
    """Pure-JAX f32 transcription of the PyTorch forward."""
    adj = adj_full.sum(axis=-1)                                    # (B,S,S)
    neigh = jnp.einsum('bij,bjd->bid', adj, inp) + inp             # (B,S,D)
    B, S, _, L = adj_full.shape
    rel = jnp.matmul(adj_full.reshape(B, S, S * L),
                     jnp.tile(rel_emb, (S, 1)))                    # (B,S,R)
    final = jnp.concatenate([neigh, rel], axis=2)
    out = jnp.matmul(final, W) + bias
    return jnp.maximum(out, 0.0) if is_relu else out


if __name__ == "__main__":
    # Small shapes consistent with the module's forward:
    #   inp (B, S, in_size), adj_full (B, S, S, L), rel_emb (L, rel_dim)
    B, S, D = 4, 8, 32          # batch, seq_num, in_size
    L, R = 4, 8                 # number of relation types, rel embedding dim
    H = D // 2                  # out_size = in_size // 2

    key = jax.random.PRNGKey(0)
    k_inp, k_adj, k_rel, k_w, k_b = jax.random.split(key, 5)

    inp = jax.random.normal(k_inp, (B, S, D), dtype=jnp.float32)
    adj_full = (jax.random.uniform(k_adj, (B, S, S, L)) < 0.3).astype(jnp.float32)
    rel_emb = jax.random.normal(k_rel, (L, R), dtype=jnp.float32)

    # Deterministic parameter init mirroring GNNRel.init(): uniform(-stdv, stdv)
    stdv = 1.0 / math.sqrt(H)
    W = jax.random.uniform(k_w, (D + R, H), minval=-stdv, maxval=stdv,
                           dtype=jnp.float32)
    bias = jax.random.uniform(k_b, (H,), minval=-stdv, maxval=stdv,
                              dtype=jnp.float32)

    out = gnn_rel(inp, adj_full, rel_emb, W, bias, is_relu=True)
    out = jax.block_until_ready(out)

    ref = gnn_rel_reference(inp, adj_full, rel_emb, W, bias, is_relu=True)
    assert out.shape == (B, S, H), out.shape
    # bf16 matmul operands / bf16 output with f32 accumulation -> widened
    # tolerance vs the pure-f32 reference.
    if not jnp.allclose(out, ref, rtol=5e-2, atol=5e-2):
        err = jnp.max(jnp.abs(out - ref))
        raise AssertionError(
            f"Pallas kernel output does not match reference (max abs err {err})")

    print("KERNEL_OK")
</pallas_src>

<mosaic_0001>
module attributes {stable_mosaic.version = 11 : i64} {
  func.func @gnn_rel_kernel(%arg0: i32, %arg1: memref<2x8x8xi8, #tpu.memory_space<vmem>>, %arg2: memref<16x4xf32, #tpu.memory_space<vmem>>, %arg3: memref<2x8x32xbf16, #tpu.memory_space<vmem>>, %arg4: memref<32x128xbf16, #tpu.memory_space<vmem>>, %arg5: memref<4x128xf32, #tpu.memory_space<vmem>>, %arg6: memref<1x128xf32, #tpu.memory_space<vmem>>, %arg7: memref<16x128xbf16, #tpu.memory_space<vmem>>) attributes {dimension_semantics = [#tpu.dimension_semantics<parallel>], iteration_bounds = array<i64: 2>, scalar_prefetch = 0 : i64, scratch_operands = 0 : i64, tpu.core_type = #tpu.core_type<tc>, window_params = [{transform_indices = @transform_0, window_bounds = array<i64: 2, 8, 8>}, {transform_indices = @transform_1, window_bounds = array<i64: 16, 4>}, {transform_indices = @transform_2, window_bounds = array<i64: 2, 8, 32>}, {pipeline_mode = #tpu.pipeline_mode<synchronous>, transform_indices = @transform_3, window_bounds = array<i64: 32, 128>}, {pipeline_mode = #tpu.pipeline_mode<synchronous>, transform_indices = @transform_4, window_bounds = array<i64: 4, 128>}, {pipeline_mode = #tpu.pipeline_mode<synchronous>, transform_indices = @transform_5, window_bounds = array<i64: 1, 128>}, {transform_indices = @transform_6, window_bounds = array<i64: 16, 128>}]} {
    %c0 = arith.constant 0 : index
    %c0_0 = arith.constant 0 : index
    %c0_1 = arith.constant 0 : index
    %0 = vector.load %arg3[%c0, %c0_0, %c0_1] : memref<2x8x32xbf16, #tpu.memory_space<vmem>>, vector<2x8x32xbf16>
    %c0_2 = arith.constant 0 : index
    %c0_3 = arith.constant 0 : index
    %c0_4 = arith.constant 0 : index
    %1 = vector.load %arg1[%c0_2, %c0_3, %c0_4] : memref<2x8x8xi8, #tpu.memory_space<vmem>>, vector<2x8x8xi8>
    %2 = arith.sitofp %1 : vector<2x8x8xi8> to vector<2x8x8xf32>
    %3 = arith.extf %0 : vector<2x8x32xbf16> to vector<2x8x32xf32>
    %4 = vector.extract_strided_slice %2 {offsets = [0, 0, 0], sizes = [2, 8, 1], strides = [1, 1, 1]} : vector<2x8x8xf32> to vector<2x8x1xf32>
    %5 = vector.extract_strided_slice %3 {offsets = [0, 0, 0], sizes = [2, 1, 32], strides = [1, 1, 1]} : vector<2x8x32xf32> to vector<2x1x32xf32>
    %6 = vector.broadcast %4 : vector<2x8x1xf32> to vector<2x8x32xf32>
    %7 = vector.broadcast %5 : vector<2x1x32xf32> to vector<2x8x32xf32>
    %8 = arith.mulf %6, %7 : vector<2x8x32xf32>
    %9 = arith.addf %3, %8 : vector<2x8x32xf32>
    %10 = vector.extract_strided_slice %2 {offsets = [0, 0, 1], sizes = [2, 8, 1], strides = [1, 1, 1]} : vector<2x8x8xf32> to vector<2x8x1xf32>
    %11 = vector.extract_strided_slice %3 {offsets = [0, 1, 0], sizes = [2, 1, 32], strides = [1, 1, 1]} : vector<2x8x32xf32> to vector<2x1x32xf32>
    %12 = vector.broadcast %10 : vector<2x8x1xf32> to vector<2x8x32xf32>
    %13 = vector.broadcast %11 : vector<2x1x32xf32> to vector<2x8x32xf32>
    %14 = arith.mulf %12, %13 : vector<2x8x32xf32>
    %15 = arith.addf %9, %14 : vector<2x8x32xf32>
    %16 = vector.extract_strided_slice %2 {offsets = [0, 0, 2], sizes = [2, 8, 1], strides = [1, 1, 1]} : vector<2x8x8xf32> to vector<2x8x1xf32>
    %17 = vector.extract_strided_slice %3 {offsets = [0, 2, 0], sizes = [2, 1, 32], strides = [1, 1, 1]} : vector<2x8x32xf32> to vector<2x1x32xf32>
    %18 = vector.broadcast %16 : vector<2x8x1xf32> to vector<2x8x32xf32>
    %19 = vector.broadcast %17 : vector<2x1x32xf32> to vector<2x8x32xf32>
    %20 = arith.mulf %18, %19 : vector<2x8x32xf32>
    %21 = arith.addf %15, %20 : vector<2x8x32xf32>
    %22 = vector.extract_strided_slice %2 {offsets = [0, 0, 3], sizes = [2, 8, 1], strides = [1, 1, 1]} : vector<2x8x8xf32> to vector<2x8x1xf32>
    %23 = vector.extract_strided_slice %3 {offsets = [0, 3, 0], sizes = [2, 1, 32], strides = [1, 1, 1]} : vector<2x8x32xf32> to vector<2x1x32xf32>
    %24 = vector.broadcast %22 : vector<2x8x1xf32> to vector<2x8x32xf32>
    %25 = vector.broadcast %23 : vector<2x1x32xf32> to vector<2x8x32xf32>
    %26 = arith.mulf %24, %25 : vector<2x8x32xf32>
    %27 = arith.addf %21, %26 : vector<2x8x32xf32>
    %28 = vector.extract_strided_slice %2 {offsets = [0, 0, 4], sizes = [2, 8, 1], strides = [1, 1, 1]} : vector<2x8x8xf32> to vector<2x8x1xf32>
    %29 = vector.extract_strided_slice %3 {offsets = [0, 4, 0], sizes = [2, 1, 32], strides = [1, 1, 1]} : vector<2x8x32xf32> to vector<2x1x32xf32>
    %30 = vector.broadcast %28 : vector<2x8x1xf32> to vector<2x8x32xf32>
    %31 = vector.broadcast %29 : vector<2x1x32xf32> to vector<2x8x32xf32>
    %32 = arith.mulf %30, %31 : vector<2x8x32xf32>
    %33 = arith.addf %27, %32 : vector<2x8x32xf32>
    %34 = vector.extract_strided_slice %2 {offsets = [0, 0, 5], sizes = [2, 8, 1], strides = [1, 1, 1]} : vector<2x8x8xf32> to vector<2x8x1xf32>
    %35 = vector.extract_strided_slice %3 {offsets = [0, 5, 0], sizes = [2, 1, 32], strides = [1, 1, 1]} : vector<2x8x32xf32> to vector<2x1x32xf32>
    %36 = vector.broadcast %34 : vector<2x8x1xf32> to vector<2x8x32xf32>
    %37 = vector.broadcast %35 : vector<2x1x32xf32> to vector<2x8x32xf32>
    %38 = arith.mulf %36, %37 : vector<2x8x32xf32>
    %39 = arith.addf %33, %38 : vector<2x8x32xf32>
    %40 = vector.extract_strided_slice %2 {offsets = [0, 0, 6], sizes = [2, 8, 1], strides = [1, 1, 1]} : vector<2x8x8xf32> to vector<2x8x1xf32>
    %41 = vector.extract_strided_slice %3 {offsets = [0, 6, 0], sizes = [2, 1, 32], strides = [1, 1, 1]} : vector<2x8x32xf32> to vector<2x1x32xf32>
    %42 = vector.broadcast %40 : vector<2x8x1xf32> to vector<2x8x32xf32>
    %43 = vector.broadcast %41 : vector<2x1x32xf32> to vector<2x8x32xf32>
    %44 = arith.mulf %42, %43 : vector<2x8x32xf32>
    %45 = arith.addf %39, %44 : vector<2x8x32xf32>
    %46 = vector.extract_strided_slice %2 {offsets = [0, 0, 7], sizes = [2, 8, 1], strides = [1, 1, 1]} : vector<2x8x8xf32> to vector<2x8x1xf32>
    %47 = vector.extract_strided_slice %3 {offsets = [0, 7, 0], sizes = [2, 1, 32], strides = [1, 1, 1]} : vector<2x8x32xf32> to vector<2x1x32xf32>
    %48 = vector.broadcast %46 : vector<2x8x1xf32> to vector<2x8x32xf32>
    %49 = vector.broadcast %47 : vector<2x1x32xf32> to vector<2x8x32xf32>
    %50 = arith.mulf %48, %49 : vector<2x8x32xf32>
    %51 = arith.addf %45, %50 : vector<2x8x32xf32>
    %52 = vector.shape_cast %51 : vector<2x8x32xf32> to vector<16x32xf32>
    %53 = arith.truncf %52 : vector<16x32xf32> to vector<16x32xbf16>
    %c0_5 = arith.constant 0 : index
    %c0_6 = arith.constant 0 : index
    %54 = vector.load %arg4[%c0_5, %c0_6] : memref<32x128xbf16, #tpu.memory_space<vmem>>, vector<32x128xbf16>
    %cst = arith.constant dense<0.000000e+00> : vector<16x128xf32>
    %55 = tpu.matmul %53, %54, %cst {dimension_numbers = #tpu.dot_dimension_numbers<[1], [0], [0], [1], [0, 0, 1, 1], [], []>} : vector<16x32xbf16>, vector<32x128xbf16>, vector<16x128xf32> -> vector<16x128xf32>
    %c0_7 = arith.constant 0 : index
    %c0_8 = arith.constant 0 : index
    %56 = vector.load %arg2[%c0_7, %c0_8] : memref<16x4xf32, #tpu.memory_space<vmem>>, vector<16x4xf32>
    %c0_9 = arith.constant 0 : index
    %c0_10 = arith.constant 0 : index
    %57 = vector.load %arg5[%c0_9, %c0_10] : memref<4x128xf32, #tpu.memory_space<vmem>>, vector<4x128xf32>
    %58 = vector.extract_strided_slice %56 {offsets = [0, 0], sizes = [16, 1], strides = [1, 1]} : vector<16x4xf32> to vector<16x1xf32>
    %59 = vector.extract_strided_slice %57 {offsets = [0, 0], sizes = [1, 128], strides = [1, 1]} : vector<4x128xf32> to vector<1x128xf32>
    %60 = vector.broadcast %58 : vector<16x1xf32> to vector<16x128xf32>
    %61 = vector.broadcast %59 : vector<1x128xf32> to vector<16x128xf32>
    %62 = arith.mulf %60, %61 : vector<16x128xf32>
    %63 = arith.addf %55, %62 : vector<16x128xf32>
    %64 = vector.extract_strided_slice %56 {offsets = [0, 1], sizes = [16, 1], strides = [1, 1]} : vector<16x4xf32> to vector<16x1xf32>
    %65 = vector.extract_strided_slice %57 {offsets = [1, 0], sizes = [1, 128], strides = [1, 1]} : vector<4x128xf32> to vector<1x128xf32>
    %66 = vector.broadcast %64 : vector<16x1xf32> to vector<16x128xf32>
    %67 = vector.broadcast %65 : vector<1x128xf32> to vector<16x128xf32>
    %68 = arith.mulf %66, %67 : vector<16x128xf32>
    %69 = arith.addf %63, %68 : vector<16x128xf32>
    %70 = vector.extract_strided_slice %56 {offsets = [0, 2], sizes = [16, 1], strides = [1, 1]} : vector<16x4xf32> to vector<16x1xf32>
    %71 = vector.extract_strided_slice %57 {offsets = [2, 0], sizes = [1, 128], strides = [1, 1]} : vector<4x128xf32> to vector<1x128xf32>
    %72 = vector.broadcast %70 : vector<16x1xf32> to vector<16x128xf32>
    %73 = vector.broadcast %71 : vector<1x128xf32> to vector<16x128xf32>
    %74 = arith.mulf %72, %73 : vector<16x128xf32>
    %75 = arith.addf %69, %74 : vector<16x128xf32>
    %76 = vector.extract_strided_slice %56 {offsets = [0, 3], sizes = [16, 1], strides = [1, 1]} : vector<16x4xf32> to vector<16x1xf32>
    %77 = vector.extract_strided_slice %57 {offsets = [3, 0], sizes = [1, 128], strides = [1, 1]} : vector<4x128xf32> to vector<1x128xf32>
    %78 = vector.broadcast %76 : vector<16x1xf32> to vector<16x128xf32>
    %79 = vector.broadcast %77 : vector<1x128xf32> to vector<16x128xf32>
    %80 = arith.mulf %78, %79 : vector<16x128xf32>
    %81 = arith.addf %75, %80 : vector<16x128xf32>
    %c0_11 = arith.constant 0 : index
    %c0_12 = arith.constant 0 : index
    %82 = vector.load %arg6[%c0_11, %c0_12] : memref<1x128xf32, #tpu.memory_space<vmem>>, vector<1x128xf32>
    %83 = vector.broadcast %82 : vector<1x128xf32> to vector<16x128xf32>
    %84 = arith.addf %81, %83 : vector<16x128xf32>
    %cst_13 = arith.constant 0.000000e+00 : f32
    %85 = vector.broadcast %cst_13 : f32 to vector<16x128xf32>
    %86 = arith.maximumf %84, %85 : vector<16x128xf32>
    %87 = arith.truncf %86 : vector<16x128xf32> to vector<16x128xbf16>
    %c0_14 = arith.constant 0 : index
    %c0_15 = arith.constant 0 : index
    %88 = vector.load %arg7[%c0_14, %c0_15] : memref<16x128xbf16, #tpu.memory_space<vmem>>, vector<16x128xbf16>
    tpu.vector_store %arg7[%c0_14, %c0_15], %87 {strides = array<i32>} : memref<16x128xbf16, #tpu.memory_space<vmem>>, vector<16x128xbf16>,
    return
  }
  func.func @transform_0(%arg0: i32) -> (i32, i32, i32) {
    %c0_i32 = arith.constant 0 : i32
    %c0_i32_0 = arith.constant 0 : i32
    %c0_i32_1 = arith.constant 0 : i32
    return %arg0, %c0_i32, %c0_i32_0 : i32, i32, i32
  }
  func.func @transform_1(%arg0: i32) -> (i32, i32) {
    %c0_i32 = arith.constant 0 : i32
    %c0_i32_0 = arith.constant 0 : i32
    return %arg0, %c0_i32 : i32, i32
  }
  func.func @transform_2(%arg0: i32) -> (i32, i32, i32) {
    %c0_i32 = arith.constant 0 : i32
    %c0_i32_0 = arith.constant 0 : i32
    %c0_i32_1 = arith.constant 0 : i32
    return %arg0, %c0_i32, %c0_i32_0 : i32, i32, i32
  }
  func.func @transform_3(%arg0: i32) -> (i32, i32) {
    %c0_i32 = arith.constant 0 : i32
    %c0_i32_0 = arith.constant 0 : i32
    %c0_i32_1 = arith.constant 0 : i32
    return %c0_i32, %c0_i32_0 : i32, i32
  }
  func.func @transform_4(%arg0: i32) -> (i32, i32) {
    %c0_i32 = arith.constant 0 : i32
    %c0_i32_0 = arith.constant 0 : i32
    %c0_i32_1 = arith.constant 0 : i32
    return %c0_i32, %c0_i32_0 : i32, i32
  }
  func.func @transform_5(%arg0: i32) -> (i32, i32) {
    %c0_i32 = arith.constant 0 : i32
    %c0_i32_0 = arith.constant 0 : i32
    %c0_i32_1 = arith.constant 0 : i32
    return %c0_i32, %c0_i32_0 : i32, i32
  }
  func.func @transform_6(%arg0: i32) -> (i32, i32) {
    %c0_i32 = arith.constant 0 : i32
    %c0_i32_0 = arith.constant 0 : i32
    return %arg0, %c0_i32 : i32, i32
  }
}

</mosaic_0001>

<llo_original>
// kernel: gnn_rel.1
$region0: #{gnn_rel.1}
  #allocation0 [shape = 'u32[]', space=smem, size = 0x4, offset = 0x4, fixed_abs, tag = 'smem constant byte address 0x4 - core index']
  #allocation1 [shape = 'u32[144,128]{1,0:T(1,128)}', space=vmem, size = 0x12000, scoped, tag = 'internal scratch']
  %s0 = inlined_call_operand.hbm [shape: s8[4,8,8], index: 0, kind: input, shape index: {}]
  %s1 = inlined_call_operand.hbm [shape: f32[32,4], index: 1, kind: input, shape index: {}]
  %s2 = inlined_call_operand.hbm [shape: bf16[4,8,32], index: 2, kind: input, shape index: {}]
  %s3 = inlined_call_operand.hbm [shape: bf16[32,128], index: 3, kind: input, shape index: {}]
  %s4 = inlined_call_operand.hbm [shape: f32[4,128], index: 4, kind: input, shape index: {}]
  %s5 = inlined_call_operand.hbm [shape: f32[1,128], index: 5, kind: input, shape index: {}]
  %s6 = inlined_call_operand.hbm [shape: bf16[32,128], index: 6, kind: output, shape index: {}]
  %s7 = sld [smem:[#allocation0]]
  $region81: #{gnn_rel.1} parent=0
    _
  %s9 = ssub.s32 1, %s7
  %s10 = scalar_select 0, %s9, %s7
  $region1: #{gnn_rel.1} parent=0
    #allocation2 [shape = 'u8[4096]{0}', space=vmem, size = 0x1000, scoped, tag = 'input window, operand 0']
    #allocation3 [shape = 's32[2]{0}', space=sflag, size = 0x8, scoped, tag = 'scoped memory for gnn_rel.1']
    #allocation4 [shape = 's32[2]{0}', space=sflag, size = 0x8, scoped, tag = 'scoped memory for gnn_rel.1']
    #allocation5 [shape = 'u8[16384]{0}', space=vmem, size = 0x4000, scoped, tag = 'input window, operand 1']
    #allocation6 [shape = 's32[2]{0}', space=sflag, size = 0x8, scoped, tag = 'scoped memory for gnn_rel.1']
    #allocation7 [shape = 'u8[8192]{0}', space=vmem, size = 0x2000, scoped, tag = 'input window, operand 2']
    #allocation8 [shape = 'u8[8192]{0}', space=vmem, size = 0x2000, scoped, tag = 'input window, operand 3, single buffered']
    #allocation9 [shape = 's32[1]{0}', space=sflag, size = 0x4, scoped, tag = 'scoped memory for gnn_rel.1']
    #allocation10 [shape = 'u8[2048]{0}', space=vmem, size = 0x800, scoped, tag = 'input window, operand 4, single buffered']
    #allocation11 [shape = 'u8[512]{0}', space=vmem, size = 0x400, scoped, tag = 'input window, operand 5, single buffered']
    #allocation12 [shape = 's32[1]{0}', space=sflag, size = 0x4, scoped, tag = 'scoped memory for gnn_rel.1']
    #allocation13 [shape = 'u8[8192]{0}', space=vmem, size = 0x2000, scoped, tag = 'output window, operand 0']
    %11 = vsyncpa [#allocation3], 0
    %s12 = scalar_lea.sflag [#allocation3], 1
    %13 = vsyncpa %s12, 0
    %14 = vsyncpa [#allocation6], 0
    %s15 = scalar_lea.sflag [#allocation6], 1
    %16 = vsyncpa %s15, 0
    %17 = vsyncpa [#allocation9], 0
    %18 = vsyncpa [#allocation12], 0
    %19 = vsyncpa [#allocation4], 0
    %s20 = scalar_lea.sflag [#allocation4], 1
    %21 = vsyncpa %s20, 0
    loop: start=0, step=1, limit=4
    $region2: #{gnn_rel.1} parent=1 // loop_pre_header
      _
    $region3: #{gnn_rel.1} parent=1 // loop_header
      %s23 = sphi 0, %s27
      %p24 = scmp.ge.s32.totalorder %s23, 4
      %s33 = sphi 0, %s35
      %s36 = sphi 0, %s33
      %s37 = sphi 0, %s36
      %s53 = sphi 0, %s37
      %s59 = sphi 0, %s61
      %s62 = sphi 0, %s59
      %s63 = sphi 0, %s62
      %s79 = sphi 0, %s63
      %s85 = sphi 0, %s87
      %s88 = sphi 0, %s85
      %s89 = sphi 0, %s88
      %s105 = sphi 0, %s89
      %s109 = sphi 0, %s109
      %s111 = sphi 0, %s109
      %s112 = sphi 0, %s111
      %s126 = sphi 0, %s112
      %s130 = sphi 0, %s130
      %s132 = sphi 0, %s130
      %s133 = sphi 0, %s132
      %s147 = sphi 0, %s133
      %s151 = sphi 0, %s151
      %s153 = sphi 0, %s151
      %s154 = sphi 0, %s153
      %s168 = sphi 0, %s154
      %s174 = sphi 0, %s176
      %s177 = sphi 0, %s174
      %s178 = sphi 0, %s177
      %s194 = sphi 0, %s178
    $region4: #{gnn_rel.1} parent=1 // loop_header_branch
      %26 = sbr.rel (%p24) target = $region8
    $region5: #{gnn_rel.1} parent=1 // loop_body
      %s28 = ssub.s32 %s23, 1
      %s29 = ssub.s32 %s23, 2
      %s30 = sadd.s32 %s23, 1
      %s31 = ssub.s32 %s23, %s30
      %p32 = scmp.eq.s32.totalorder %s31, 0
      %s34 = sadd.s32 %s33, 1
      %s35 = scalar_select %p32, %s33, %s34
      %p38 = pneg %p32
      %p39 = scmp.eq.s32.totalorder %s23, 1
      %p40 = por %p38, %p39
      %p41 = scmp.ne.s32.totalorder %s33, %s36
      %p42 = scmp.eq.s32.totalorder %s23, 0
      %p43 = por %p41, %p42
      %p44 = scmp.ne.s32.totalorder %s33, %s36
      %p45 = scmp.eq.s32.totalorder %s28, 1
      %p46 = por %p44, %p45
      %p47 = scmp.ne.s32.totalorder %s36, %s37
      %p48 = scmp.eq.s32.totalorder %s28, 0
      %p49 = por %p47, %p48
      %p50 = scmp.ne.s32.totalorder %s36, %s37
      %p51 = scmp.eq.s32.totalorder %s29, 1
      %p52 = por %p50, %p51
      %p54 = scmp.ne.s32.totalorder %s37, %s53
      %p55 = scmp.eq.s32.totalorder %s29, 0
      %p56 = por %p54, %p55
      %s57 = ssub.s32 %s23, %s30
      %p58 = scmp.eq.s32.totalorder %s57, 0
      %s60 = sadd.s32 %s59, 1
      %s61 = scalar_select %p58, %s59, %s60
      %p64 = pneg %p58
      %p65 = scmp.eq.s32.totalorder %s23, 1
      %p66 = por %p64, %p65
      %p67 = scmp.ne.s32.totalorder %s59, %s62
      %p68 = scmp.eq.s32.totalorder %s23, 0
      %p69 = por %p67, %p68
      %p70 = scmp.ne.s32.totalorder %s59, %s62
      %p71 = scmp.eq.s32.totalorder %s28, 1
      %p72 = por %p70, %p71
      %p73 = scmp.ne.s32.totalorder %s62, %s63
      %p74 = scmp.eq.s32.totalorder %s28, 0
      %p75 = por %p73, %p74
      %p76 = scmp.ne.s32.totalorder %s62, %s63
      %p77 = scmp.eq.s32.totalorder %s29, 1
      %p78 = por %p76, %p77
      %p80 = scmp.ne.s32.totalorder %s63, %s79
      %p81 = scmp.eq.s32.totalorder %s29, 0
      %p82 = por %p80, %p81
      %s83 = ssub.s32 %s23, %s30
      %p84 = scmp.eq.s32.totalorder %s83, 0
      %s86 = sadd.s32 %s85, 1
      %s87 = scalar_select %p84, %s85, %s86
      %p90 = pneg %p84
      %p91 = scmp.eq.s32.totalorder %s23, 1
      %p92 = por %p90, %p91
      %p93 = scmp.ne.s32.totalorder %s85, %s88
      %p94 = scmp.eq.s32.totalorder %s23, 0
      %p95 = por %p93, %p94
      %p96 = scmp.ne.s32.totalorder %s85, %s88
      %p97 = scmp.eq.s32.totalorder %s28, 1
      %p98 = por %p96, %p97
      %p99 = scmp.ne.s32.totalorder %s88, %s89
      %p100 = scmp.eq.s32.totalorder %s28, 0
      %p101 = por %p99, %p100
      %p102 = scmp.ne.s32.totalorder %s88, %s89
      %p103 = scmp.eq.s32.totalorder %s29, 1
      %p104 = por %p102, %p103
      %p106 = scmp.ne.s32.totalorder %s89, %s105
      %p107 = scmp.eq.s32.totalorder %s29, 0
      %p108 = por %p106, %p107
      %s110 = sadd.s32 %s109, 1
      %p113 = scmp.eq.s32.totalorder %s23, 1
      %p114 = scmp.ne.s32.totalorder %s109, %s111
      %p115 = scmp.eq.s32.totalorder %s23, 0
      %p116 = por %p114, %p115
      %p117 = scmp.ne.s32.totalorder %s109, %s111
      %p118 = scmp.eq.s32.totalorder %s28, 1
      %p119 = por %p117, %p118
      %p120 = scmp.ne.s32.totalorder %s111, %s112
      %p121 = scmp.eq.s32.totalorder %s28, 0
      %p122 = por %p120, %p121
      %p123 = scmp.ne.s32.totalorder %s111, %s112
      %p124 = scmp.eq.s32.totalorder %s29, 1
      %p125 = por %p123, %p124
      %p127 = scmp.ne.s32.totalorder %s112, %s126
      %p128 = scmp.eq.s32.totalorder %s29, 0
      %p129 = por %p127, %p128
      %s131 = sadd.s32 %s130, 1
      %p134 = scmp.eq.s32.totalorder %s23, 1
      %p135 = scmp.ne.s32.totalorder %s130, %s132
      %p136 = scmp.eq.s32.totalorder %s23, 0
      %p137 = por %p135, %p136
      %p138 = scmp.ne.s32.totalorder %s130, %s132
      %p139 = scmp.eq.s32.totalorder %s28, 1
      %p140 = por %p138, %p139
      %p141 = scmp.ne.s32.totalorder %s132, %s133
      %p142 = scmp.eq.s32.totalorder %s28, 0
      %p143 = por %p141, %p142
      %p144 = scmp.ne.s32.totalorder %s132, %s133
      %p145 = scmp.eq.s32.totalorder %s29, 1
      %p146 = por %p144, %p145
      %p148 = scmp.ne.s32.totalorder %s133, %s147
      %p149 = scmp.eq.s32.totalorder %s29, 0
      %p150 = por %p148, %p149
      %s152 = sadd.s32 %s151, 1
      %p155 = scmp.eq.s32.totalorder %s23, 1
      %p156 = scmp.ne.s32.totalorder %s151, %s153
      %p157 = scmp.eq.s32.totalorder %s23, 0
      %p158 = por %p156, %p157
      %p159 = scmp.ne.s32.totalorder %s151, %s153
      %p160 = scmp.eq.s32.totalorder %s28, 1
      %p161 = por %p159, %p160
      %p162 = scmp.ne.s32.totalorder %s153, %s154
      %p163 = scmp.eq.s32.totalorder %s28, 0
      %p164 = por %p162, %p163
      %p165 = scmp.ne.s32.totalorder %s153, %s154
      %p166 = scmp.eq.s32.totalorder %s29, 1
      %p167 = por %p165, %p166
      %p169 = scmp.ne.s32.totalorder %s154, %s168
      %p170 = scmp.eq.s32.totalorder %s29, 0
      %p171 = por %p169, %p170
      %s172 = ssub.s32 %s23, %s30
      %p173 = scmp.eq.s32.totalorder %s172, 0
      %s175 = sadd.s32 %s174, 1
      %s176 = scalar_select %p173, %s174, %s175
      %p179 = pneg %p173
      %p180 = scmp.eq.s32.totalorder %s23, 1
      %p181 = por %p179, %p180
      %p182 = scmp.ne.s32.totalorder %s174, %s177
      %p183 = scmp.eq.s32.totalorder %s23, 0
      %p184 = por %p182, %p183
      %p185 = scmp.ne.s32.totalorder %s174, %s177
      %p186 = scmp.eq.s32.totalorder %s28, 1
      %p187 = por %p185, %p186
      %p188 = scmp.ne.s32.totalorder %s177, %s178
      %p189 = scmp.eq.s32.totalorder %s28, 0
      %p190 = por %p188, %p189
      %p191 = scmp.ne.s32.totalorder %s177, %s178
      %p192 = scmp.eq.s32.totalorder %s29, 1
      %p193 = por %p191, %p192
      %p195 = scmp.ne.s32.totalorder %s178, %s194
      %p196 = scmp.eq.s32.totalorder %s29, 0
      %p197 = por %p195, %p196
      %p198 = scmp.le.s32.totalorder 1, %s23
      %p199 = scmp.lt.s32.totalorder %s23, 3
      %p200 = pnand %p198, %p199
      %p201 = pneg %p200
      // Predicated region
      $region9: #{gnn_rel.1} parent=5 // pred_check
        _
      $region10: #{gnn_rel.1} parent=5 // pred_check_branch
        %203 = sbr.rel (%p200) target = $region12
      $region11: #{gnn_rel.1} parent=5 // pred_region
        %s204 = ssub.s32 %s23, 1
        // Predicated region
        $region13: #{gnn_rel.1} parent=11 // pred_check
          %p205 = pneg %p122
        $region14: #{gnn_rel.1} parent=11 // pred_check_branch
          %207 = sbr.rel (%p205) target = $region16
        $region15: #{gnn_rel.1} parent=11 // pred_region
          %s209 = ssub.s32 256, 256
          %210 = vsyncadd [#allocation9], %s209
          %s211 = sshll.u32 [#allocation8], 4
          %s212 = int_to_ptr.vmem [resolvable:$true] %s211
          %217 = dma.hbm_to_vmem [thread:$0]  %s3, 256, %s212, [#allocation9], 64, 64, 4
        $region16: #{gnn_rel.1} parent=11 // pred_fallthru
          _
        // Predicated region
        $region17: #{gnn_rel.1} parent=11 // pred_check
          %p218 = pneg %p143
        $region18: #{gnn_rel.1} parent=11 // pred_check_branch
          %220 = sbr.rel (%p218) target = $region20
        $region19: #{gnn_rel.1} parent=11 // pred_region
          %s222 = ssub.s32 64, 64
          %223 = vsyncadd [#allocation9], %s222
          %s225 = sshll.u32 [#allocation10], 4
          %s226 = int_to_ptr.vmem [resolvable:$true] %s225
          %228 = dma.hbm_to_vmem [thread:$0]  %s4, 64, %s226, [#allocation9]
        $region20: #{gnn_rel.1} parent=11 // pred_fallthru
          _
        // Predicated region
        $region21: #{gnn_rel.1} parent=11 // pred_check
          %p229 = pneg %p164
        $region22: #{gnn_rel.1} parent=11 // pred_check_branch
          %231 = sbr.rel (%p229) target = $region24
        $region23: #{gnn_rel.1} parent=11 // pred_region
          %s233 = ssub.s32 16, 16
          %234 = vsyncadd [#allocation12], %s233
          %s236 = sshll.u32 [#allocation11], 4
          %s237 = int_to_ptr.vmem [resolvable:$true] %s236
          %239 = dma.hbm_to_vmem [thread:$0]  %s5, 16, %s237, [#allocation12]
        $region24: #{gnn_rel.1} parent=11 // pred_fallthru
          _
      $region12: #{gnn_rel.1} parent=5 // pred_fallthru
        _
      %p240 = scmp.lt.s32.totalorder %s23, 2
      // Predicated region
      $region25: #{gnn_rel.1} parent=5 // pred_check
        %p241 = pneg %p240
      $region26: #{gnn_rel.1} parent=5 // pred_check_branch
        %243 = sbr.rel (%p241) target = $region28
      $region27: #{gnn_rel.1} parent=5 // pred_region
        // Predicated region
        $region29: #{gnn_rel.1} parent=27 // pred_check
          %p244 = pneg %p43
        $region30: #{gnn_rel.1} parent=27 // pred_check_branch
          %246 = sbr.rel (%p244) target = $region32
        $region31: #{gnn_rel.1} parent=27 // pred_region
          %s247 = sand.u32 %s33, 1
          %s248 = scalar_lea.sflag [#allocation3], %s247
          %s249 = sand.u32 %s33, 1
          %s250 = smul.addr %s249, 4
          %s251 = scalar_lea.vmem [#allocation2], %s250
          %s252 = smul.u32 2, %s23
          %s254 = ssub.s32 64, 64
          %255 = vsyncadd %s248, %s254
          %s256 = smul.addr %s252, 32
          %s257 = scalar_lea.hbm %s0, %s256
          %s258 = sshll.u32 %s251, 4
          %s259 = int_to_ptr.vmem [resolvable:$true] %s258
          %264 = dma.hbm_to_vmem [thread:$0]  %s257, 64, %s259, %s248, 32, 32, 2
        $region32: #{gnn_rel.1} parent=27 // pred_fallthru
          _
        // Predicated region
        $region33: #{gnn_rel.1} parent=27 // pred_check
          %p265 = pneg %p69
        $region34: #{gnn_rel.1} parent=27 // pred_check_branch
          %267 = sbr.rel (%p265) target = $region36
        $region35: #{gnn_rel.1} parent=27 // pred_region
          %s268 = sand.u32 %s23, 1
          %s269 = scalar_lea.sflag [#allocation6], %s268
          %s270 = sand.u32 %s59, 1
          %s271 = smul.addr %s270, 16
          %s272 = scalar_lea.vmem [#allocation5], %s271
          %s273 = smul.u32 2, %s23
          %s275 = ssub.s32 256, 256
          %276 = vsyncadd %s269, %s275
          %s277 = smul.addr %s273, 128
          %s278 = scalar_lea.hbm %s1, %s277
          %s279 = sshll.u32 %s272, 4
          %s280 = int_to_ptr.vmem [resolvable:$true] %s279
          %285 = dma.hbm_to_vmem [thread:$0]  %s278, 256, %s280, %s269, 128, 128, 8
        $region36: #{gnn_rel.1} parent=27 // pred_fallthru
          _
        // Predicated region
        $region37: #{gnn_rel.1} parent=27 // pred_check
          %p286 = pneg %p95
        $region38: #{gnn_rel.1} parent=27 // pred_check_branch
          %288 = sbr.rel (%p286) target = $region40
        $region39: #{gnn_rel.1} parent=27 // pred_region
          %s289 = sand.u32 %s23, 1
          %s290 = scalar_lea.sflag [#allocation6], %s289
          %s291 = sand.u32 %s85, 1
          %s292 = smul.addr %s291, 8
          %s293 = scalar_lea.vmem [#allocation7], %s292
          %s294 = smul.u32 2, %s23
          %s296 = ssub.s32 128, 128
          %297 = vsyncadd %s290, %s296
          %s298 = smul.addr %s294, 64
          %s299 = scalar_lea.hbm %s2, %s298
          %s300 = sshll.u32 %s293, 4
          %s301 = int_to_ptr.vmem [resolvable:$true] %s300
          %306 = dma.hbm_to_vmem [thread:$0]  %s299, 128, %s301, %s290, 64, 64, 4
        $region40: #{gnn_rel.1} parent=27 // pred_fallthru
          _
      $region28: #{gnn_rel.1} parent=5 // pred_fallthru
        _
      %p307 = scmp.le.s32.totalorder 1, %s23
      %p308 = scmp.lt.s32.totalorder %s23, 3
      %p309 = pnand %p307, %p308
      %p310 = pneg %p309
      // Predicated region
      $region41: #{gnn_rel.1} parent=5 // pred_check
        _
      $region42: #{gnn_rel.1} parent=5 // pred_check_branch
        %312 = sbr.rel (%p309) target = $region44
      $region43: #{gnn_rel.1} parent=5 // pred_region
        %s313 = ssub.s32 %s23, 1
        %s314 = sand.u32 %s36, 1
        %s315 = scalar_lea.sflag [#allocation3], %s314
        %s316 = sand.u32 %s36, 1
        %s317 = smul.addr %s316, 4
        %s318 = scalar_lea.vmem [#allocation2], %s317
        // Predicated region
        $region45: #{gnn_rel.1} parent=43 // pred_check
          %p319 = pneg %p49
        $region46: #{gnn_rel.1} parent=43 // pred_check_branch
          %321 = sbr.rel (%p319) target = $region48
        $region47: #{gnn_rel.1} parent=43 // pred_region
          %322 = dma.done %s315, 64
        $region48: #{gnn_rel.1} parent=43 // pred_fallthru
          _
        %s323 = sand.u32 %s28, 1
        %s324 = scalar_lea.sflag [#allocation6], %s323
        %s325 = sand.u32 %s62, 1
        %s326 = smul.addr %s325, 16
        %s327 = scalar_lea.vmem [#allocation5], %s326
        // Predicated region
        $region49: #{gnn_rel.1} parent=43 // pred_check
          %p328 = pneg %p75
        $region50: #{gnn_rel.1} parent=43 // pred_check_branch
          %330 = sbr.rel (%p328) target = $region52
        $region51: #{gnn_rel.1} parent=43 // pred_region
          %331 = dma.done %s324, 256
        $region52: #{gnn_rel.1} parent=43 // pred_fallthru
          _
        %s332 = sand.u32 %s28, 1
        %s333 = scalar_lea.sflag [#allocation6], %s332
        %s334 = sand.u32 %s88, 1
        %s335 = smul.addr %s334, 8
        %s336 = scalar_lea.vmem [#allocation7], %s335
        // Predicated region
        $region53: #{gnn_rel.1} parent=43 // pred_check
          %p337 = pneg %p101
        $region54: #{gnn_rel.1} parent=43 // pred_check_branch
          %339 = sbr.rel (%p337) target = $region56
        $region55: #{gnn_rel.1} parent=43 // pred_region
          %340 = dma.done %s333, 128
        $region56: #{gnn_rel.1} parent=43 // pred_fallthru
          _
        // Predicated region
        $region57: #{gnn_rel.1} parent=43 // pred_check
          %p341 = pneg %p122
        $region58: #{gnn_rel.1} parent=43 // pred_check_branch
          %343 = sbr.rel (%p341) target = $region60
        $region59: #{gnn_rel.1} parent=43 // pred_region
          %344 = dma.done [#allocation9], 256
        $region60: #{gnn_rel.1} parent=43 // pred_fallthru
          _
        // Predicated region
        $region61: #{gnn_rel.1} parent=43 // pred_check
          %p345 = pneg %p143
        $region62: #{gnn_rel.1} parent=43 // pred_check_branch
          %347 = sbr.rel (%p345) target = $region64
        $region63: #{gnn_rel.1} parent=43 // pred_region
          %348 = dma.done [#allocation9], 64
        $region64: #{gnn_rel.1} parent=43 // pred_fallthru
          _
        // Predicated region
        $region65: #{gnn_rel.1} parent=43 // pred_check
          %p349 = pneg %p164
        $region66: #{gnn_rel.1} parent=43 // pred_check_branch
          %351 = sbr.rel (%p349) target = $region68
        $region67: #{gnn_rel.1} parent=43 // pred_region
          %352 = dma.done [#allocation12], 16
        $region68: #{gnn_rel.1} parent=43 // pred_fallthru
          _
        %s353 = sand.u32 %s36, 1
        %s354 = scalar_lea.sflag [#allocation3], %s353
        %s355 = sand.u32 %s36, 1
        %s356 = smul.addr %s355, 4
        %s357 = scalar_lea.vmem [#allocation2], %s356
        %p358 = pneg %p49
        %p359 = pneg %p46
        %s360 = sand.u32 %s28, 1
        %s361 = scalar_lea.sflag [#allocation6], %s360
        %s362 = sand.u32 %s62, 1
        %s363 = smul.addr %s362, 16
        %s364 = scalar_lea.vmem [#allocation5], %s363
        %p365 = pneg %p75
        %p366 = pneg %p72
        %s367 = sand.u32 %s28, 1
        %s368 = scalar_lea.sflag [#allocation6], %s367
        %s369 = sand.u32 %s88, 1
        %s370 = smul.addr %s369, 8
        %s371 = scalar_lea.vmem [#allocation7], %s370
        %p372 = pneg %p101
        %p373 = pneg %p98
        %p374 = pneg %p122
        %p375 = pneg %p119
        %p376 = pneg %p143
        %p377 = pneg %p140
        %p378 = pneg %p164
        %p379 = pneg %p161
        %p380 = pneg %p190
        %p381 = pneg %p187
        %s382 = sand.u32 %s177, 1
        %s383 = scalar_lea.sflag [#allocation4], %s382
        %s384 = sand.u32 %s177, 1
        %s385 = smul.addr %s384, 8
        %s386 = scalar_lea.vmem [#allocation13], %s385
        %s387 = smul.u32 2, %s28
        %s388 = smul.u32 2, %s28
        %s389 = smul.u32 2, %s28
        %s390 = smul.u32 2, %s28
        %v392 = vld [vmem:[%s336] sm:$0xf]
        %v393 = vld [vmem:[%s336 + $0x4] sm:$0xf]
        %v394 = vld [vmem:[%s318] sm:$0x3]
        %v395 = vld [vmem:[%s318 + $0x2] sm:$0x3]
        %v396 = vunpack.c.0.s8 %v394
        %v397 = vunpack.c.0.s8 %v395
        %v398 = vcvt.s32.f32 %v396
        %v399 = vcvt.s32.f32 %v397
        %v400 = vunpack.c.l.bf16 %v392
        %v401 = vunpack.c.l.bf16 %v393
        %403 = vset.pattern.permute.xlu0 0
        %404 = vperm.xlu0 %403, %v398
        %v405 = vpop.permute.xlu0 %404
        %408 = vset.pattern.permute.xlu0 0
        %409 = vperm.xlu0 %408, %v399
        %v410 = vpop.permute.xlu0 %409
        %v412 = vlaneseq
        %v413 = vshrl.u32 %v412, 7
        %v414 = vsub.s32 0, %v413
        %v415 = vrot.slane %v400, %v414
        %v416 = vlaneseq
        %v417 = vshrl.u32 %v416, 7
        %v418 = vsub.s32 0, %v417
        %v419 = vrot.slane %v401, %v418
        %v420 = vmul.f32 %v405, %v415
        %v421 = vmul.f32 %v410, %v419
        %v422 = vadd.f32 %v400, %v420
        %v423 = vadd.f32 %v401, %v421
        %424 = vset.pattern.permute.xlu0 1
        %425 = vperm.xlu0 %424, %v398
        %v426 = vpop.permute.xlu0 %425
        %428 = vset.pattern.permute.xlu0 1
        %429 = vperm.xlu0 %428, %v399
        %v430 = vpop.permute.xlu0 %429
        %v432 = vlaneseq
        %v433 = vshrl.u32 %v432, 7
        %v434 = vsub.s32 1, %v433
        %v435 = vrot.slane %v400, %v434
        %v436 = vlaneseq
        %v437 = vshrl.u32 %v436, 7
        %v438 = vsub.s32 1, %v437
        %v439 = vrot.slane %v401, %v438
        %v440 = vmul.f32 %v426, %v435
        %v441 = vmul.f32 %v430, %v439
        %v442 = vadd.f32 %v422, %v440
        %v443 = vadd.f32 %v423, %v441
        %444 = vset.pattern.permute.xlu0 2
        %445 = vperm.xlu0 %444, %v398
        %v446 = vpop.permute.xlu0 %445
        %448 = vset.pattern.permute.xlu0 2
        %449 = vperm.xlu0 %448, %v399
        %v450 = vpop.permute.xlu0 %449
        %v452 = vlaneseq
        %v453 = vshrl.u32 %v452, 7
        %v454 = vsub.s32 2, %v453
        %v455 = vrot.slane %v400, %v454
        %v456 = vlaneseq
        %v457 = vshrl.u32 %v456, 7
        %v458 = vsub.s32 2, %v457
        %v459 = vrot.slane %v401, %v458
        %v460 = vmul.f32 %v446, %v455
        %v461 = vmul.f32 %v450, %v459
        %v462 = vadd.f32 %v442, %v460
        %v463 = vadd.f32 %v443, %v461
        %464 = vset.pattern.permute.xlu0 3
        %465 = vperm.xlu0 %464, %v398
        %v466 = vpop.permute.xlu0 %465
        %468 = vset.pattern.permute.xlu0 3
        %469 = vperm.xlu0 %468, %v399
        %v470 = vpop.permute.xlu0 %469
        %v472 = vlaneseq
        %v473 = vshrl.u32 %v472, 7
        %v474 = vsub.s32 3, %v473
        %v475 = vrot.slane %v400, %v474
        %v476 = vlaneseq
        %v477 = vshrl.u32 %v476, 7
        %v478 = vsub.s32 3, %v477
        %v479 = vrot.slane %v401, %v478
        %v480 = vmul.f32 %v466, %v475
        %v481 = vmul.f32 %v470, %v479
        %v482 = vadd.f32 %v462, %v480
        %v483 = vadd.f32 %v463, %v481
        %484 = vset.pattern.permute.xlu0 4
        %485 = vperm.xlu0 %484, %v398
        %v486 = vpop.permute.xlu0 %485
        %488 = vset.pattern.permute.xlu0 4
        %489 = vperm.xlu0 %488, %v399
        %v490 = vpop.permute.xlu0 %489
        %v492 = vlaneseq
        %v493 = vshrl.u32 %v492, 7
        %v494 = vsub.s32 4, %v493
        %v495 = vrot.slane %v400, %v494
        %v496 = vlaneseq
        %v497 = vshrl.u32 %v496, 7
        %v498 = vsub.s32 4, %v497
        %v499 = vrot.slane %v401, %v498
        %v500 = vmul.f32 %v486, %v495
        %v501 = vmul.f32 %v490, %v499
        %v502 = vadd.f32 %v482, %v500
        %v503 = vadd.f32 %v483, %v501
        %504 = vset.pattern.permute.xlu0 5
        %505 = vperm.xlu0 %504, %v398
        %v506 = vpop.permute.xlu0 %505
        %508 = vset.pattern.permute.xlu0 5
        %509 = vperm.xlu0 %508, %v399
        %v510 = vpop.permute.xlu0 %509
        %v512 = vlaneseq
        %v513 = vshrl.u32 %v512, 7
        %v514 = vsub.s32 5, %v513
        %v515 = vrot.slane %v400, %v514
        %v516 = vlaneseq
        %v517 = vshrl.u32 %v516, 7
        %v518 = vsub.s32 5, %v517
        %v519 = vrot.slane %v401, %v518
        %v520 = vmul.f32 %v506, %v515
        %v521 = vmul.f32 %v510, %v519
        %v522 = vadd.f32 %v502, %v520
        %v523 = vadd.f32 %v503, %v521
        %524 = vset.pattern.permute.xlu0 6
        %525 = vperm.xlu0 %524, %v398
        %v526 = vpop.permute.xlu0 %525
        %528 = vset.pattern.permute.xlu0 6
        %529 = vperm.xlu0 %528, %v399
        %v530 = vpop.permute.xlu0 %529
        %v532 = vlaneseq
        %v533 = vshrl.u32 %v532, 7
        %v534 = vsub.s32 6, %v533
        %v535 = vrot.slane %v400, %v534
        %v536 = vlaneseq
        %v537 = vshrl.u32 %v536, 7
        %v538 = vsub.s32 6, %v537
        %v539 = vrot.slane %v401, %v538
        %v540 = vmul.f32 %v526, %v535
        %v541 = vmul.f32 %v530, %v539
        %v542 = vadd.f32 %v522, %v540
        %v543 = vadd.f32 %v523, %v541
        %544 = vset.pattern.permute.xlu0 7
        %545 = vperm.xlu0 %544, %v398
        %v546 = vpop.permute.xlu0 %545
        %548 = vset.pattern.permute.xlu0 7
        %549 = vperm.xlu0 %548, %v399
        %v550 = vpop.permute.xlu0 %549
        %v552 = vlaneseq
        %v553 = vshrl.u32 %v552, 7
        %v554 = vsub.s32 7, %v553
        %v555 = vrot.slane %v400, %v554
        %v556 = vlaneseq
        %v557 = vshrl.u32 %v556, 7
        %v558 = vsub.s32 7, %v557
        %v559 = vrot.slane %v401, %v558
        %v560 = vmul.f32 %v546, %v555
        %v561 = vmul.f32 %v550, %v559
        %v562 = vadd.f32 %v542, %v560
        %v563 = vadd.f32 %v543, %v561
        %v564 = vpack.c.bf16 %v563, %v562
        %v565 = vld [vmem:[#allocation8] sm:$0xf]
        %v566 = vld [vmem:[#allocation8 + $0x4] sm:$0xf]
        %v567 = vld [vmem:[#allocation8 + $0x8] sm:$0xf]
        %v568 = vld [vmem:[#allocation8 + $0xc] sm:$0xf]
        %v569 = vld [vmem:[%s327] sm:$0xff]
        %v570 = vld [vmem:[%s327 + $0x8] sm:$0xff]
        %v571 = vld [vmem:[#allocation10] sm:$0xf]
        %573 = vset.pattern.permute.xlu0 0
        %574 = vperm.xlu0 %573, %v569
        %v575 = vpop.permute.xlu0 %574
        %578 = vset.pattern.permute.xlu0 0
        %579 = vperm.xlu0 %578, %v570
        %v580 = vpop.permute.xlu0 %579
        %v582 = vlaneseq
        %v583 = vshrl.u32 %v582, 7
        %v584 = vsub.s32 0, %v583
        %v585 = vrot.slane %v571, %v584
        %v586 = vmul.f32 %v575, %v585
        %v587 = vmul.f32 %v580, %v585
        %v592 = vunpack.c.l.b16 %v565
        %v593 = vunpack.c.l.b16 %v566
        %v594 = vunpack.c.l.b16 %v567
        %v595 = vunpack.c.l.b16 %v568
        %v596 = vpack.c.b16 %v593, %v592
        %v597 = vpack.c.b16 %v595, %v594
        %vm600 = vcmask 261120
        %v602 = vsel %vm600, %v564, 0
        %604 = vmatprep.subr.bf16.mxu0 0
        %605 = vmatpush1.bf16.msra.mxu0 %v596
        %606 = vmatprep.subr.bf16.mxu0 0
        %607 = vmatpush1.bf16.msra.mxu0 %v597
        %608 = vmatprep.subr.bf16.mxu0 0
        %609 = vmatpush1.bf16.msra.mxu0 0
        %610 = vmatprep.subr.bf16.mxu0 0
        %611 = vmatpush1.bf16.msra.mxu0 0
        %612 = vmatprep.subr.bf16.mxu0 0
        %613 = vmatpush1.bf16.msra.mxu0 0
        %614 = vmatprep.subr.bf16.mxu0 0
        %615 = vmatpush1.bf16.msra.mxu0 0
        %616 = vmatprep.subr.bf16.mxu0 0
        %617 = vmatpush1.bf16.msra.mxu0 0
        %618 = vmatprep.subr.bf16.mxu0 0
        %619 = vmatpush1.bf16.msra.mxu0 0
        %620 = vmatprep.subr.bf16.mxu0 0
        %621 = vmatpush1.bf16.msra.mxu0 0
        %622 = vmatprep.subr.bf16.mxu0 0
        %623 = vmatpush1.bf16.msra.mxu0 0
        %624 = vmatprep.subr.bf16.mxu0 0
        %625 = vmatpush1.bf16.msra.mxu0 0
        %626 = vmatprep.subr.bf16.mxu0 0
        %627 = vmatpush1.bf16.msra.mxu0 0
        %628 = vmatprep.subr.bf16.mxu0 0
        %629 = vmatpush1.bf16.msra.mxu0 0
        %630 = vmatprep.subr.bf16.mxu0 0
        %631 = vmatpush1.bf16.msra.mxu0 0
        %632 = vmatprep.subr.bf16.mxu0 0
        %633 = vmatpush1.bf16.msra.mxu0 0
        %634 = vmatprep.subr.bf16.mxu0 0
        %635 = vmatpush1.bf16.msra.mxu0 0
        %636 = vmatprep.mubr.bf16.mxu0 0
        %637 = vmatmul.mubr.bf16.gmra.mrb[0].mxu0 %v602
        %v638 = vpop.f32.mrb[0].mxu0
        %v639 = vadd.f32 %v586, %v638
        %v640 = vpop.f32.mrb[0].mxu0
        %v641 = vpop.f32.mrb[0].mxu0
        %v642 = vadd.f32 %v587, %v641
        %v643 = vpop.f32.mrb[0].mxu0
        %644 = vdwg.mxu0
        %645 = vset.pattern.permute.xlu0 1
        %646 = vperm.xlu0 %645, %v569
        %v647 = vpop.permute.xlu0 %646
        %649 = vset.pattern.permute.xlu0 1
        %650 = vperm.xlu0 %649, %v570
        %v651 = vpop.permute.xlu0 %650
        %v653 = vlaneseq
        %v654 = vshrl.u32 %v653, 7
        %v655 = vsub.s32 1, %v654
        %v656 = vrot.slane %v571, %v655
        %v657 = vmul.f32 %v647, %v656
        %v658 = vmul.f32 %v651, %v656
        %v659 = vadd.f32 %v639, %v657
        %v660 = vadd.f32 %v642, %v658
        %661 = vset.pattern.permute.xlu0 2
        %662 = vperm.xlu0 %661, %v569
        %v663 = vpop.permute.xlu0 %662
        %665 = vset.pattern.permute.xlu0 2
        %666 = vperm.xlu0 %665, %v570
        %v667 = vpop.permute.xlu0 %666
        %v669 = vlaneseq
        %v670 = vshrl.u32 %v669, 7
        %v671 = vsub.s32 2, %v670
        %v672 = vrot.slane %v571, %v671
        %v673 = vmul.f32 %v663, %v672
        %v674 = vmul.f32 %v667, %v672
        %v675 = vadd.f32 %v659, %v673
        %v676 = vadd.f32 %v660, %v674
        %677 = vset.pattern.permute.xlu0 3
        %678 = vperm.xlu0 %677, %v569
        %v679 = vpop.permute.xlu0 %678
        %681 = vset.pattern.permute.xlu0 3
        %682 = vperm.xlu0 %681, %v570
        %v683 = vpop.permute.xlu0 %682
        %v685 = vlaneseq
        %v686 = vshrl.u32 %v685, 7
        %v687 = vsub.s32 3, %v686
        %v688 = vrot.slane %v571, %v687
        %v689 = vmul.f32 %v679, %v688
        %v690 = vmul.f32 %v683, %v688
        %v691 = vadd.f32 %v675, %v689
        %v692 = vadd.f32 %v676, %v690
        %v693 = vld [vmem:[#allocation11] sm:$0x1]
        %v695 = vlaneseq
        %v696 = vshrl.u32 %v695, 7
        %v697 = vsub.s32 0, %v696
        %v698 = vrot.slane %v693, %v697
        %v700 = vadd.f32 %v691, %v698
        %v701 = vadd.f32 %v692, %v698
        %v702 = vmax.f32 %v700, 0.0
        %v703 = vmax.f32 %v701, 0.0
        %v704 = vpack.c.bf16 %v703, %v702
        %v706 = vunpack.c.l.b16 %v704
        %v707 = vunpack.c.h.b16 %v704
        %v708 = vpack.c.b16 %v706, %v706
        %v709 = vpack.c.b16 %v707, %v707
        %712 = vst [vmem:[%s386] sm:$0xf] %v708
        %713 = vst [vmem:[%s386 + $0x4] sm:$0xf] %v709
        %s714 = sand.u32 %s177, 1
        %s715 = scalar_lea.sflag [#allocation4], %s714
        %s716 = sand.u32 %s177, 1
        %s717 = smul.addr %s716, 8
        %s718 = scalar_lea.vmem [#allocation13], %s717
        // Predicated region
        $region69: #{gnn_rel.1} parent=43 // pred_check
          %p719 = pneg %p187
        $region70: #{gnn_rel.1} parent=43 // pred_check_branch
          %721 = sbr.rel (%p719) target = $region72
        $region71: #{gnn_rel.1} parent=43 // pred_region
          %s722 = smul.u32 2, %s28
          %s724 = ssub.s32 128, 128
          %725 = vsyncadd %s715, %s724
          %s726 = smul.addr %s722, 64
          %s727 = scalar_lea.hbm %s6, %s726
          %s728 = sshll.u32 %s718, 4
          %s729 = int_to_ptr.vmem [resolvable:$true] %s728
          %734 = dma.vmem_to_hbm [thread:$0]  %s729, 128, %s727, %s715, 64, 64, 4
        $region72: #{gnn_rel.1} parent=43 // pred_fallthru
          _
      $region44: #{gnn_rel.1} parent=5 // pred_fallthru
        _
      %p735 = scmp.le.s32.totalorder 2, %s23
      // Predicated region
      $region73: #{gnn_rel.1} parent=5 // pred_check
        %p736 = pneg %p735
      $region74: #{gnn_rel.1} parent=5 // pred_check_branch
        %738 = sbr.rel (%p736) target = $region76
      $region75: #{gnn_rel.1} parent=5 // pred_region
        %s739 = ssub.s32 %s23, 2
        // Predicated region
        $region77: #{gnn_rel.1} parent=75 // pred_check
          %p740 = pneg %p193
        $region78: #{gnn_rel.1} parent=75 // pred_check_branch
          %742 = sbr.rel (%p740) target = $region80
        $region79: #{gnn_rel.1} parent=75 // pred_region
          %s743 = sand.u32 %s178, 1
          %s744 = scalar_lea.sflag [#allocation4], %s743
          %s745 = sand.u32 %s178, 1
          %s746 = smul.addr %s745, 8
          %s747 = scalar_lea.vmem [#allocation13], %s746
          %748 = dma.done %s744, 128
        $region80: #{gnn_rel.1} parent=75 // pred_fallthru
          _
      $region76: #{gnn_rel.1} parent=5 // pred_fallthru
        _
    $region6: #{gnn_rel.1} parent=1 // loop_footer
      %s27 = sadd.s32 1, %s23
    $region7: #{gnn_rel.1} parent=1 // loop_footer_branch
      %22 = sbr.rel target = $region3
    $region8: #{gnn_rel.1} parent=1 // loop_exit
      _
    %749 = vsyncpa [#allocation3], 1
    %s750 = scalar_lea.sflag [#allocation3], 1
    %751 = vsyncpa %s750, 1
    %752 = vsyncpa [#allocation6], 1
    %s753 = scalar_lea.sflag [#allocation6], 1
    %754 = vsyncpa %s753, 1
    %755 = vsyncpa [#allocation9], 1
    %756 = vsyncpa [#allocation12], 1
    %757 = vsyncpa [#allocation4], 1
    %s758 = scalar_lea.sflag [#allocation4], 1
    %759 = vsyncpa %s758, 1

</llo_original>
